<compile_context>
chip_gen: v6e
topology: v6e:2x2x1
jax: 0.10.0
libtpu: 0.0.40
codegen_flags: <defaults>
</compile_context>

<pallas_src>
import functools

import jax
import jax.numpy as jnp
import numpy as np
from jax.experimental import pallas as pl
from jax.experimental.pallas import tpu as pltpu

ATS_PRIMITIVES = ("none", "identity", "se", "sse")


def mixat_kernel(w_ref, x_ref, w1t_ref, b1_ref, w2t_ref, b2_ref, ws_ref, bs_ref,
                 o_ref, *, inv_hw):
    # w_ref  : (4,)          mixture weights, SMEM scalars
    # x_ref  : (Bn, C, HWp)  batch tile, native dtype, VMEM
    # w1t_ref: (C, Cr), b1_ref: (1, Cr)   -- SE fc1 (pre-transposed)
    # w2t_ref: (Cr, C), b2_ref: (1, C)    -- SE fc2 (pre-transposed)
    # ws_ref : (1, C),  bs_ref: (1, 1)    -- spatial-SE 1x1 conv
    x = x_ref[...].astype(jnp.float32)                               # (Bn, C, HWp)

    # --- 'se': channel squeeze-and-excitation (padded lanes are zero -> exact sum) ---
    gap = jnp.sum(x, axis=-1) * inv_hw                               # (Bn, C)
    h = jnp.maximum(
        jnp.dot(gap, w1t_ref[...], preferred_element_type=jnp.float32)
        + b1_ref[...], 0.0)                                          # (Bn, Cr)
    g_c = jax.nn.sigmoid(
        jnp.dot(h, w2t_ref[...], preferred_element_type=jnp.float32)
        + b2_ref[...])                                               # (Bn, C)

    # --- 'sse': spatial squeeze-and-excitation (1x1 conv C->1 == weighted C-reduce) ---
    ws3 = ws_ref[...][:, :, None]                                    # (1, C, 1)
    g_s = jax.nn.sigmoid(jnp.sum(x * ws3, axis=1) + bs_ref[...])     # (Bn, HWp)

    # --- fused mixture: 'none' contributes 0, so out = x * gate ---
    gate = (w_ref[1] + w_ref[2] * g_c)[:, :, None] \
        + (w_ref[3] * g_s)[:, None, :]                               # (Bn, C, HWp)
    o_ref[...] = (x * gate).astype(o_ref.dtype)


def _choose_bn(n, bytes_per_elem, target_bytes=2 << 20):
    """Batch elements per grid step: ~target_bytes per tile, but keep >=2 grid steps."""
    bn = max(1, min(n, target_bytes // max(int(bytes_per_elem), 1)))
    if n >= 2 and bn >= n:          # keep both v7x TensorCores busy
        bn = -(-n // 2)
    return int(bn)


@jax.jit
def mixat_pallas(x, weights_at, params):
    N, C, H, W = x.shape
    HW = H * W
    HWp = -(-HW // 128) * 128                       # lane-dense last dim
    dtype = x.dtype
    itemsize = jnp.dtype(dtype).itemsize

    bn = _choose_bn(N, C * HWp * itemsize)
    n_pad = -(-N // bn) * bn

    x_flat = x.reshape(N, C, HW)
    if HWp != HW or n_pad != N:
        x_flat = jnp.pad(x_flat, ((0, n_pad - N), (0, 0), (0, HWp - HW)))

    se_w1, se_b1, se_w2, se_b2, sse_w, sse_b = params
    Cr = se_w1.shape[0]
    w1t = se_w1.T.astype(jnp.float32)               # (C, Cr)
    b1 = se_b1.T.astype(jnp.float32)                # (1, Cr)
    w2t = se_w2.T.astype(jnp.float32)               # (Cr, C)
    b2 = se_b2.T.astype(jnp.float32)                # (1, C)
    ws = sse_w.astype(jnp.float32)                  # (1, C)
    bs = sse_b.astype(jnp.float32)                  # (1, 1)
    w_at = weights_at.astype(jnp.float32)

    # Explicit VMEM budget: double-buffered in+out tiles + f32 temporaries + params/slack.
    io_block = bn * C * HWp * itemsize
    f32_block = bn * C * HWp * 4
    budget = 2 * 2 * io_block + 4 * f32_block + (1 << 20)
    vmem_limit = int(min(48 << 20, max(budget, 32 << 20)))

    kern = functools.partial(mixat_kernel, inv_hw=float(1.0 / HW))
    out = pl.pallas_call(
        kern,
        out_shape=jax.ShapeDtypeStruct((n_pad, C, HWp), dtype),
        grid=(n_pad // bn,),
        in_specs=[
            pl.BlockSpec(memory_space=pltpu.MemorySpace.SMEM),    # weights_at (scalars)
            pl.BlockSpec((bn, C, HWp), lambda n: (n, 0, 0)),      # x tile
            pl.BlockSpec((C, Cr), lambda n: (0, 0)),
            pl.BlockSpec((1, Cr), lambda n: (0, 0)),
            pl.BlockSpec((Cr, C), lambda n: (0, 0)),
            pl.BlockSpec((1, C), lambda n: (0, 0)),
            pl.BlockSpec((1, C), lambda n: (0, 0)),
            pl.BlockSpec((1, 1), lambda n: (0, 0)),
        ],
        out_specs=pl.BlockSpec((bn, C, HWp), lambda n: (n, 0, 0)),
        compiler_params=pltpu.CompilerParams(
            dimension_semantics=("parallel",),
            vmem_limit_bytes=vmem_limit),
    )(w_at, x_flat, w1t, b1, w2t, b2, ws, bs)

    out = out[:N, :, :HW]
    return out.reshape(N, C, H, W)


def mixat_ref(x, weights_at, params):
    """Pure-JAX reference (mirrors the PyTorch MixAt.forward semantics)."""
    se_w1, se_b1, se_w2, se_b2, sse_w, sse_b = params
    xf = x.astype(jnp.float32)
    gap = jnp.mean(xf, axis=(2, 3))                                 # (N, C)
    h = jax.nn.relu(gap @ se_w1.T + se_b1[:, 0])                    # (N, Cr)
    g_c = jax.nn.sigmoid(h @ se_w2.T + se_b2[:, 0])                 # (N, C)
    se_out = xf * g_c[:, :, None, None]
    g_s = jax.nn.sigmoid(jnp.einsum("oc,nchw->nohw", sse_w, xf) + sse_b[0, 0])  # (N,1,H,W)
    sse_out = xf * g_s
    ops = [jnp.zeros_like(xf), xf, se_out, sse_out]                 # none, identity, se, sse
    return sum(w * op for w, op in zip(weights_at, ops)).astype(x.dtype)


if __name__ == "__main__":
    key = jax.random.PRNGKey(0)
    k = jax.random.split(key, 8)

    N, C, H, W = 2, 8, 16, 16
    Cr = max(C // 4, 1)

    x = jax.random.normal(k[0], (N, C, H, W), jnp.float32)
    # DARTS softmaxes the architecture parameters before mixing.
    weights_at = jax.nn.softmax(jax.random.normal(k[1], (len(ATS_PRIMITIVES),), jnp.float32))

    se_w1 = jax.random.normal(k[2], (Cr, C), jnp.float32) * 0.5
    se_b1 = jax.random.normal(k[3], (Cr, 1), jnp.float32) * 0.1
    se_w2 = jax.random.normal(k[4], (C, Cr), jnp.float32) * 0.5
    se_b2 = jax.random.normal(k[5], (C, 1), jnp.float32) * 0.1
    sse_w = jax.random.normal(k[6], (1, C), jnp.float32) * 0.5
    sse_b = jax.random.normal(k[7], (1, 1), jnp.float32) * 0.1
    params = (se_w1, se_b1, se_w2, se_b2, sse_w, sse_b)

    out = jax.block_until_ready(mixat_pallas(x, weights_at, params))
    ref = mixat_ref(x, weights_at, params)
    np.testing.assert_allclose(np.asarray(out), np.asarray(ref), rtol=2e-3, atol=2e-3)
    print("KERNEL_OK")
</pallas_src>

<mosaic_0001>
module attributes {stable_mosaic.version = 11 : i64} {
  func.func @mixat_kernel(%arg0: i32, %arg1: memref<4xf32, #tpu.memory_space<smem>>, %arg2: memref<1x8x256xf32, #tpu.memory_space<vmem>>, %arg3: memref<8x2xf32, #tpu.memory_space<vmem>>, %arg4: memref<1x2xf32, #tpu.memory_space<vmem>>, %arg5: memref<2x8xf32, #tpu.memory_space<vmem>>, %arg6: memref<1x8xf32, #tpu.memory_space<vmem>>, %arg7: memref<1x8xf32, #tpu.memory_space<vmem>>, %arg8: memref<1x1xf32, #tpu.memory_space<vmem>>, %arg9: memref<1x8x256xf32, #tpu.memory_space<vmem>>) attributes {dimension_semantics = [#tpu.dimension_semantics<parallel>], iteration_bounds = array<i64: 2>, scalar_prefetch = 0 : i64, scratch_operands = 0 : i64, tpu.core_type = #tpu.core_type<tc>, window_params = [{transform_indices = @transform_0, window_bounds = array<i64: 4>}, {transform_indices = @transform_1, window_bounds = array<i64: 1, 8, 256>}, {pipeline_mode = #tpu.pipeline_mode<synchronous>, transform_indices = @transform_2, window_bounds = array<i64: 8, 2>}, {pipeline_mode = #tpu.pipeline_mode<synchronous>, transform_indices = @transform_3, window_bounds = array<i64: 1, 2>}, {pipeline_mode = #tpu.pipeline_mode<synchronous>, transform_indices = @transform_4, window_bounds = array<i64: 2, 8>}, {pipeline_mode = #tpu.pipeline_mode<synchronous>, transform_indices = @transform_5, window_bounds = array<i64: 1, 8>}, {pipeline_mode = #tpu.pipeline_mode<synchronous>, transform_indices = @transform_6, window_bounds = array<i64: 1, 8>}, {pipeline_mode = #tpu.pipeline_mode<synchronous>, transform_indices = @transform_7, window_bounds = array<i64: 1, 1>}, {transform_indices = @transform_8, window_bounds = array<i64: 1, 8, 256>}]} {
    %c0 = arith.constant 0 : index
    %c0_0 = arith.constant 0 : index
    %c0_1 = arith.constant 0 : index
    %0 = vector.load %arg2[%c0, %c0_0, %c0_1] : memref<1x8x256xf32, #tpu.memory_space<vmem>>, vector<1x8x256xf32>
    %cst = arith.constant dense<0.000000e+00> : vector<1x8xf32>
    %1 = vector.multi_reduction <add>, %0, %cst [2] : vector<1x8x256xf32> to vector<1x8xf32>
    %cst_2 = arith.constant 3.906250e-03 : f32
    %2 = vector.broadcast %cst_2 : f32 to vector<1x8xf32>
    %3 = arith.mulf %1, %2 : vector<1x8xf32>
    %c0_3 = arith.constant 0 : index
    %c0_4 = arith.constant 0 : index
    %4 = vector.load %arg3[%c0_3, %c0_4] : memref<8x2xf32, #tpu.memory_space<vmem>>, vector<8x2xf32>
    %cst_5 = arith.constant dense<0.000000e+00> : vector<1x2xf32>
    %5 = tpu.matmul %3, %4, %cst_5 {dimension_numbers = #tpu.dot_dimension_numbers<[1], [0], [0], [1], [0, 0, 1, 1], [], []>} : vector<1x8xf32>, vector<8x2xf32>, vector<1x2xf32> -> vector<1x2xf32>
    %c0_6 = arith.constant 0 : index
    %c0_7 = arith.constant 0 : index
    %6 = vector.load %arg4[%c0_6, %c0_7] : memref<1x2xf32, #tpu.memory_space<vmem>>, vector<1x2xf32>
    %7 = arith.addf %5, %6 : vector<1x2xf32>
    %cst_8 = arith.constant 0.000000e+00 : f32
    %8 = vector.broadcast %cst_8 : f32 to vector<1x2xf32>
    %9 = arith.maximumf %7, %8 : vector<1x2xf32>
    %c0_9 = arith.constant 0 : index
    %c0_10 = arith.constant 0 : index
    %10 = vector.load %arg5[%c0_9, %c0_10] : memref<2x8xf32, #tpu.memory_space<vmem>>, vector<2x8xf32>
    %cst_11 = arith.constant dense<0.000000e+00> : vector<1x8xf32>
    %11 = tpu.matmul %9, %10, %cst_11 {dimension_numbers = #tpu.dot_dimension_numbers<[1], [0], [0], [1], [0, 0, 1, 1], [], []>} : vector<1x2xf32>, vector<2x8xf32>, vector<1x8xf32> -> vector<1x8xf32>
    %c0_12 = arith.constant 0 : index
    %c0_13 = arith.constant 0 : index
    %12 = vector.load %arg6[%c0_12, %c0_13] : memref<1x8xf32, #tpu.memory_space<vmem>>, vector<1x8xf32>
    %13 = arith.addf %11, %12 : vector<1x8xf32>
    %14 = arith.negf %13 : vector<1x8xf32>
    %15 = math.exp %14 : vector<1x8xf32>
    %cst_14 = arith.constant 1.000000e+00 : f32
    %16 = vector.broadcast %cst_14 : f32 to vector<1x8xf32>
    %17 = arith.addf %16, %15 : vector<1x8xf32>
    %18 = arith.divf %16, %17 : vector<1x8xf32>
    %c0_15 = arith.constant 0 : index
    %c0_16 = arith.constant 0 : index
    %19 = vector.load %arg7[%c0_15, %c0_16] : memref<1x8xf32, #tpu.memory_space<vmem>>, vector<1x8xf32>
    %20 = vector.shape_cast %19 : vector<1x8xf32> to vector<1x8x1xf32>
    %21 = vector.broadcast %20 : vector<1x8x1xf32> to vector<1x8x256xf32>
    %22 = arith.mulf %0, %21 : vector<1x8x256xf32>
    %cst_17 = arith.constant dense<0.000000e+00> : vector<1x256xf32>
    %23 = vector.multi_reduction <add>, %22, %cst_17 [1] : vector<1x8x256xf32> to vector<1x256xf32>
    %c0_18 = arith.constant 0 : index
    %c0_19 = arith.constant 0 : index
    %24 = vector.load %arg8[%c0_18, %c0_19] : memref<1x1xf32, #tpu.memory_space<vmem>>, vector<1x1xf32>
    %25 = vector.broadcast %24 : vector<1x1xf32> to vector<1x256xf32>
    %26 = arith.addf %23, %25 : vector<1x256xf32>
    %27 = arith.negf %26 : vector<1x256xf32>
    %28 = math.exp %27 : vector<1x256xf32>
    %cst_20 = arith.constant 1.000000e+00 : f32
    %29 = vector.broadcast %cst_20 : f32 to vector<1x256xf32>
    %30 = arith.addf %29, %28 : vector<1x256xf32>
    %31 = arith.divf %29, %30 : vector<1x256xf32>
    %c1 = arith.constant 1 : index
    %32 = memref.load %arg1[%c1] : memref<4xf32, #tpu.memory_space<smem>>
    %c2 = arith.constant 2 : index
    %33 = memref.load %arg1[%c2] : memref<4xf32, #tpu.memory_space<smem>>
    %34 = vector.broadcast %33 : f32 to vector<1x8xf32>
    %35 = arith.mulf %34, %18 : vector<1x8xf32>
    %36 = vector.broadcast %32 : f32 to vector<1x8xf32>
    %37 = arith.addf %36, %35 : vector<1x8xf32>
    %38 = vector.shape_cast %37 : vector<1x8xf32> to vector<1x8x1xf32>
    %c3 = arith.constant 3 : index
    %39 = memref.load %arg1[%c3] : memref<4xf32, #tpu.memory_space<smem>>
    %40 = vector.broadcast %39 : f32 to vector<1x256xf32>
    %41 = arith.mulf %40, %31 : vector<1x256xf32>
    %42 = vector.shape_cast %41 : vector<1x256xf32> to vector<1x1x256xf32>
    %43 = vector.broadcast %38 : vector<1x8x1xf32> to vector<1x8x256xf32>
    %44 = vector.broadcast %42 : vector<1x1x256xf32> to vector<1x8x256xf32>
    %45 = arith.addf %43, %44 : vector<1x8x256xf32>
    %46 = arith.mulf %0, %45 : vector<1x8x256xf32>
    %c0_21 = arith.constant 0 : index
    %c0_22 = arith.constant 0 : index
    %c0_23 = arith.constant 0 : index
    %47 = vector.load %arg9[%c0_21, %c0_22, %c0_23] : memref<1x8x256xf32, #tpu.memory_space<vmem>>, vector<1x8x256xf32>
    tpu.vector_store %arg9[%c0_21, %c0_22, %c0_23], %46 {strides = array<i32>} : memref<1x8x256xf32, #tpu.memory_space<vmem>>, vector<1x8x256xf32>,
    return
  }
  func.func @transform_0(%arg0: i32) -> i32 {
    %c0_i32 = arith.constant 0 : i32
    %c0_i32_0 = arith.constant 0 : i32
    return %c0_i32 : i32
  }
  func.func @transform_1(%arg0: i32) -> (i32, i32, i32) {
    %c0_i32 = arith.constant 0 : i32
    %c0_i32_0 = arith.constant 0 : i32
    %c0_i32_1 = arith.constant 0 : i32
    return %arg0, %c0_i32, %c0_i32_0 : i32, i32, i32
  }
  func.func @transform_2(%arg0: i32) -> (i32, i32) {
    %c0_i32 = arith.constant 0 : i32
    %c0_i32_0 = arith.constant 0 : i32
    %c0_i32_1 = arith.constant 0 : i32
    return %c0_i32, %c0_i32_0 : i32, i32
  }
  func.func @transform_3(%arg0: i32) -> (i32, i32) {
    %c0_i32 = arith.constant 0 : i32
    %c0_i32_0 = arith.constant 0 : i32
    %c0_i32_1 = arith.constant 0 : i32
    return %c0_i32, %c0_i32_0 : i32, i32
  }
  func.func @transform_4(%arg0: i32) -> (i32, i32) {
    %c0_i32 = arith.constant 0 : i32
    %c0_i32_0 = arith.constant 0 : i32
    %c0_i32_1 = arith.constant 0 : i32
    return %c0_i32, %c0_i32_0 : i32, i32
  }
  func.func @transform_5(%arg0: i32) -> (i32, i32) {
    %c0_i32 = arith.constant 0 : i32
    %c0_i32_0 = arith.constant 0 : i32
    %c0_i32_1 = arith.constant 0 : i32
    return %c0_i32, %c0_i32_0 : i32, i32
  }
  func.func @transform_6(%arg0: i32) -> (i32, i32) {
    %c0_i32 = arith.constant 0 : i32
    %c0_i32_0 = arith.constant 0 : i32
    %c0_i32_1 = arith.constant 0 : i32
    return %c0_i32, %c0_i32_0 : i32, i32
  }
  func.func @transform_7(%arg0: i32) -> (i32, i32) {
    %c0_i32 = arith.constant 0 : i32
    %c0_i32_0 = arith.constant 0 : i32
    %c0_i32_1 = arith.constant 0 : i32
    return %c0_i32, %c0_i32_0 : i32, i32
  }
  func.func @transform_8(%arg0: i32) -> (i32, i32, i32) {
    %c0_i32 = arith.constant 0 : i32
    %c0_i32_0 = arith.constant 0 : i32
    %c0_i32_1 = arith.constant 0 : i32
    return %arg0, %c0_i32, %c0_i32_0 : i32, i32, i32
  }
}

</mosaic_0001>

<llo_original>
// kernel: mixat_pallas.1
$region0: #{mixat_pallas.1}
  #allocation0 [shape = 'u32[]', space=smem, size = 0x4, offset = 0x4, fixed_abs, tag = 'smem constant byte address 0x4 - core index']
  #allocation1 [shape = 'u32[144,128]{1,0:T(1,128)}', space=vmem, size = 0x12000, scoped, tag = 'internal scratch']
  #allocation2 [shape = 'f32[1,1]{1,0:T(1,128)S(1)}', space=vmem, size = 0x200, scoped, tag = 'scoped memory for mixat_pallas.1']
  %s0 = inlined_call_operand.vmem [shape: f32[4], index: 0, kind: input, shape index: {}]
  %s1 = inlined_call_operand.vmem [shape: f32[2,8,256], index: 1, kind: input, shape index: {}]
  %s2 = inlined_call_operand.vmem [shape: f32[8,2], index: 2, kind: input, shape index: {}]
  %s3 = inlined_call_operand.vmem [shape: f32[1,2], index: 3, kind: input, shape index: {}]
  %s4 = inlined_call_operand.vmem [shape: f32[2,8], index: 4, kind: input, shape index: {}]
  %s5 = inlined_call_operand.vmem [shape: f32[1,8], index: 5, kind: input, shape index: {}]
  %s6 = inlined_call_operand.vmem [shape: f32[1,8], index: 6, kind: input, shape index: {}]
  %s7 = inlined_call_operand.<no memory space> [shape: f32[1,1], index: 7, kind: input, shape index: {}]
  %s8 = inlined_call_operand.vmem [shape: f32[2,8,256], index: 8, kind: output, shape index: {}]
  %s9 = sld [smem:[#allocation0]]
  $region69: #{mixat_pallas.1} parent=0
    _
  %s11 = ssub.s32 1, %s9
  %s12 = scalar_select 0, %s11, %s9
  %v13 = vstv %s7
  %14 = vst [vmem:[#allocation2] sm:$0x1] %v13
  $region1: #{mixat_pallas.1} parent=0
    #allocation3 [shape = 'u8[512]{0}', space=smem, size = 0x200, scoped, tag = 'input window, operand 0, single buffered']
    #allocation4 [shape = 's32[2]{0}', space=sflag, size = 0x8, scoped, tag = 'scoped memory for mixat_pallas.1']
    %15 = vsyncpa [#allocation4], 0
    loop: start=0, step=1, limit=4
    $region2: #{mixat_pallas.1} parent=1 // loop_pre_header
      _
    $region3: #{mixat_pallas.1} parent=1 // loop_header
      %s17 = sphi 0, %s21
      %p18 = scmp.ge.s32.totalorder %s17, 4
      %s25 = sphi 0, %s25
      %s27 = sphi 0, %s25
      %s28 = sphi 0, %s27
      %s42 = sphi 0, %s28
      %s48 = sphi 0, %s50
      %s51 = sphi 0, %s48
      %s52 = sphi 0, %s51
      %s68 = sphi 0, %s52
      %s72 = sphi 0, %s72
      %s74 = sphi 0, %s72
      %s75 = sphi 0, %s74
      %s89 = sphi 0, %s75
      %s93 = sphi 0, %s93
      %s95 = sphi 0, %s93
      %s96 = sphi 0, %s95
      %s110 = sphi 0, %s96
      %s114 = sphi 0, %s114
      %s116 = sphi 0, %s114
      %s117 = sphi 0, %s116
      %s131 = sphi 0, %s117
      %s135 = sphi 0, %s135
      %s137 = sphi 0, %s135
      %s138 = sphi 0, %s137
      %s152 = sphi 0, %s138
      %s156 = sphi 0, %s156
      %s158 = sphi 0, %s156
      %s159 = sphi 0, %s158
      %s173 = sphi 0, %s159
      %s177 = sphi 0, %s177
      %s179 = sphi 0, %s177
      %s180 = sphi 0, %s179
      %s194 = sphi 0, %s180
      %s200 = sphi 0, %s202
      %s203 = sphi 0, %s200
      %s204 = sphi 0, %s203
      %s220 = sphi 0, %s204
    $region4: #{mixat_pallas.1} parent=1 // loop_header_branch
      %20 = sbr.rel (%p18) target = $region8
    $region5: #{mixat_pallas.1} parent=1 // loop_body
      %s22 = ssub.s32 %s17, 1
      %s23 = ssub.s32 %s17, 2
      %s24 = sadd.s32 %s17, 1
      %s26 = sadd.s32 %s25, 1
      %p29 = scmp.eq.s32.totalorder %s17, 1
      %p30 = scmp.ne.s32.totalorder %s25, %s27
      %p31 = scmp.eq.s32.totalorder %s17, 0
      %p32 = por %p30, %p31
      %p33 = scmp.ne.s32.totalorder %s25, %s27
      %p34 = scmp.eq.s32.totalorder %s22, 1
      %p35 = por %p33, %p34
      %p36 = scmp.ne.s32.totalorder %s27, %s28
      %p37 = scmp.eq.s32.totalorder %s22, 0
      %p38 = por %p36, %p37
      %p39 = scmp.ne.s32.totalorder %s27, %s28
      %p40 = scmp.eq.s32.totalorder %s23, 1
      %p41 = por %p39, %p40
      %p43 = scmp.ne.s32.totalorder %s28, %s42
      %p44 = scmp.eq.s32.totalorder %s23, 0
      %p45 = por %p43, %p44
      %s46 = ssub.s32 %s17, %s24
      %p47 = scmp.eq.s32.totalorder %s46, 0
      %s49 = sadd.s32 %s48, 1
      %s50 = scalar_select %p47, %s48, %s49
      %p53 = pneg %p47
      %p54 = scmp.eq.s32.totalorder %s17, 1
      %p55 = por %p53, %p54
      %p56 = scmp.ne.s32.totalorder %s48, %s51
      %p57 = scmp.eq.s32.totalorder %s17, 0
      %p58 = por %p56, %p57
      %p59 = scmp.ne.s32.totalorder %s48, %s51
      %p60 = scmp.eq.s32.totalorder %s22, 1
      %p61 = por %p59, %p60
      %p62 = scmp.ne.s32.totalorder %s51, %s52
      %p63 = scmp.eq.s32.totalorder %s22, 0
      %p64 = por %p62, %p63
      %p65 = scmp.ne.s32.totalorder %s51, %s52
      %p66 = scmp.eq.s32.totalorder %s23, 1
      %p67 = por %p65, %p66
      %p69 = scmp.ne.s32.totalorder %s52, %s68
      %p70 = scmp.eq.s32.totalorder %s23, 0
      %p71 = por %p69, %p70
      %s73 = sadd.s32 %s72, 1
      %p76 = scmp.eq.s32.totalorder %s17, 1
      %p77 = scmp.ne.s32.totalorder %s72, %s74
      %p78 = scmp.eq.s32.totalorder %s17, 0
      %p79 = por %p77, %p78
      %p80 = scmp.ne.s32.totalorder %s72, %s74
      %p81 = scmp.eq.s32.totalorder %s22, 1
      %p82 = por %p80, %p81
      %p83 = scmp.ne.s32.totalorder %s74, %s75
      %p84 = scmp.eq.s32.totalorder %s22, 0
      %p85 = por %p83, %p84
      %p86 = scmp.ne.s32.totalorder %s74, %s75
      %p87 = scmp.eq.s32.totalorder %s23, 1
      %p88 = por %p86, %p87
      %p90 = scmp.ne.s32.totalorder %s75, %s89
      %p91 = scmp.eq.s32.totalorder %s23, 0
      %p92 = por %p90, %p91
      %s94 = sadd.s32 %s93, 1
      %p97 = scmp.eq.s32.totalorder %s17, 1
      %p98 = scmp.ne.s32.totalorder %s93, %s95
      %p99 = scmp.eq.s32.totalorder %s17, 0
      %p100 = por %p98, %p99
      %p101 = scmp.ne.s32.totalorder %s93, %s95
      %p102 = scmp.eq.s32.totalorder %s22, 1
      %p103 = por %p101, %p102
      %p104 = scmp.ne.s32.totalorder %s95, %s96
      %p105 = scmp.eq.s32.totalorder %s22, 0
      %p106 = por %p104, %p105
      %p107 = scmp.ne.s32.totalorder %s95, %s96
      %p108 = scmp.eq.s32.totalorder %s23, 1
      %p109 = por %p107, %p108
      %p111 = scmp.ne.s32.totalorder %s96, %s110
      %p112 = scmp.eq.s32.totalorder %s23, 0
      %p113 = por %p111, %p112
      %s115 = sadd.s32 %s114, 1
      %p118 = scmp.eq.s32.totalorder %s17, 1
      %p119 = scmp.ne.s32.totalorder %s114, %s116
      %p120 = scmp.eq.s32.totalorder %s17, 0
      %p121 = por %p119, %p120
      %p122 = scmp.ne.s32.totalorder %s114, %s116
      %p123 = scmp.eq.s32.totalorder %s22, 1
      %p124 = por %p122, %p123
      %p125 = scmp.ne.s32.totalorder %s116, %s117
      %p126 = scmp.eq.s32.totalorder %s22, 0
      %p127 = por %p125, %p126
      %p128 = scmp.ne.s32.totalorder %s116, %s117
      %p129 = scmp.eq.s32.totalorder %s23, 1
      %p130 = por %p128, %p129
      %p132 = scmp.ne.s32.totalorder %s117, %s131
      %p133 = scmp.eq.s32.totalorder %s23, 0
      %p134 = por %p132, %p133
      %s136 = sadd.s32 %s135, 1
      %p139 = scmp.eq.s32.totalorder %s17, 1
      %p140 = scmp.ne.s32.totalorder %s135, %s137
      %p141 = scmp.eq.s32.totalorder %s17, 0
      %p142 = por %p140, %p141
      %p143 = scmp.ne.s32.totalorder %s135, %s137
      %p144 = scmp.eq.s32.totalorder %s22, 1
      %p145 = por %p143, %p144
      %p146 = scmp.ne.s32.totalorder %s137, %s138
      %p147 = scmp.eq.s32.totalorder %s22, 0
      %p148 = por %p146, %p147
      %p149 = scmp.ne.s32.totalorder %s137, %s138
      %p150 = scmp.eq.s32.totalorder %s23, 1
      %p151 = por %p149, %p150
      %p153 = scmp.ne.s32.totalorder %s138, %s152
      %p154 = scmp.eq.s32.totalorder %s23, 0
      %p155 = por %p153, %p154
      %s157 = sadd.s32 %s156, 1
      %p160 = scmp.eq.s32.totalorder %s17, 1
      %p161 = scmp.ne.s32.totalorder %s156, %s158
      %p162 = scmp.eq.s32.totalorder %s17, 0
      %p163 = por %p161, %p162
      %p164 = scmp.ne.s32.totalorder %s156, %s158
      %p165 = scmp.eq.s32.totalorder %s22, 1
      %p166 = por %p164, %p165
      %p167 = scmp.ne.s32.totalorder %s158, %s159
      %p168 = scmp.eq.s32.totalorder %s22, 0
      %p169 = por %p167, %p168
      %p170 = scmp.ne.s32.totalorder %s158, %s159
      %p171 = scmp.eq.s32.totalorder %s23, 1
      %p172 = por %p170, %p171
      %p174 = scmp.ne.s32.totalorder %s159, %s173
      %p175 = scmp.eq.s32.totalorder %s23, 0
      %p176 = por %p174, %p175
      %s178 = sadd.s32 %s177, 1
      %p181 = scmp.eq.s32.totalorder %s17, 1
      %p182 = scmp.ne.s32.totalorder %s177, %s179
      %p183 = scmp.eq.s32.totalorder %s17, 0
      %p184 = por %p182, %p183
      %p185 = scmp.ne.s32.totalorder %s177, %s179
      %p186 = scmp.eq.s32.totalorder %s22, 1
      %p187 = por %p185, %p186
      %p188 = scmp.ne.s32.totalorder %s179, %s180
      %p189 = scmp.eq.s32.totalorder %s22, 0
      %p190 = por %p188, %p189
      %p191 = scmp.ne.s32.totalorder %s179, %s180
      %p192 = scmp.eq.s32.totalorder %s23, 1
      %p193 = por %p191, %p192
      %p195 = scmp.ne.s32.totalorder %s180, %s194
      %p196 = scmp.eq.s32.totalorder %s23, 0
      %p197 = por %p195, %p196
      %s198 = ssub.s32 %s17, %s24
      %p199 = scmp.eq.s32.totalorder %s198, 0
      %s201 = sadd.s32 %s200, 1
      %s202 = scalar_select %p199, %s200, %s201
      %p205 = pneg %p199
      %p206 = scmp.eq.s32.totalorder %s17, 1
      %p207 = por %p205, %p206
      %p208 = scmp.ne.s32.totalorder %s200, %s203
      %p209 = scmp.eq.s32.totalorder %s17, 0
      %p210 = por %p208, %p209
      %p211 = scmp.ne.s32.totalorder %s200, %s203
      %p212 = scmp.eq.s32.totalorder %s22, 1
      %p213 = por %p211, %p212
      %p214 = scmp.ne.s32.totalorder %s203, %s204
      %p215 = scmp.eq.s32.totalorder %s22, 0
      %p216 = por %p214, %p215
      %p217 = scmp.ne.s32.totalorder %s203, %s204
      %p218 = scmp.eq.s32.totalorder %s23, 1
      %p219 = por %p217, %p218
      %p221 = scmp.ne.s32.totalorder %s204, %s220
      %p222 = scmp.eq.s32.totalorder %s23, 0
      %p223 = por %p221, %p222
      %p224 = scmp.le.s32.totalorder 1, %s17
      %p225 = scmp.lt.s32.totalorder %s17, 3
      %p226 = pnand %p224, %p225
      %p227 = pneg %p226
      // Predicated region
      $region9: #{mixat_pallas.1} parent=5 // pred_check
        _
      $region10: #{mixat_pallas.1} parent=5 // pred_check_branch
        %229 = sbr.rel (%p226) target = $region12
      $region11: #{mixat_pallas.1} parent=5 // pred_region
        %s230 = ssub.s32 %s17, 1
        // Predicated region
        $region13: #{mixat_pallas.1} parent=11 // pred_check
          %p231 = pneg %p38
        $region14: #{mixat_pallas.1} parent=11 // pred_check_branch
          %233 = sbr.rel (%p231) target = $region16
        $region15: #{mixat_pallas.1} parent=11 // pred_region
          %s235 = ssub.s32 16, 16
          %236 = vsyncadd [#allocation4], %s235
          %s238 = sshll.u32 %s0, 4
          %s239 = int_to_ptr.vmem [resolvable:$true] %s238
          %241 = dma.vmem_to_smem %s239, 16, [#allocation3], [#allocation4]
        $region16: #{mixat_pallas.1} parent=11 // pred_fallthru
          _
        // Predicated region
        $region17: #{mixat_pallas.1} parent=11 // pred_check
          %p242 = pneg %p85
        $region18: #{mixat_pallas.1} parent=11 // pred_check_branch
          %244 = sbr.rel (%p242) target = $region20
        $region19: #{mixat_pallas.1} parent=11 // pred_region
          _
        $region20: #{mixat_pallas.1} parent=11 // pred_fallthru
          _
        // Predicated region
        $region21: #{mixat_pallas.1} parent=11 // pred_check
          %p245 = pneg %p106
        $region22: #{mixat_pallas.1} parent=11 // pred_check_branch
          %247 = sbr.rel (%p245) target = $region24
        $region23: #{mixat_pallas.1} parent=11 // pred_region
          _
        $region24: #{mixat_pallas.1} parent=11 // pred_fallthru
          _
        // Predicated region
        $region25: #{mixat_pallas.1} parent=11 // pred_check
          %p248 = pneg %p127
        $region26: #{mixat_pallas.1} parent=11 // pred_check_branch
          %250 = sbr.rel (%p248) target = $region28
        $region27: #{mixat_pallas.1} parent=11 // pred_region
          _
        $region28: #{mixat_pallas.1} parent=11 // pred_fallthru
          _
        // Predicated region
        $region29: #{mixat_pallas.1} parent=11 // pred_check
          %p251 = pneg %p148
        $region30: #{mixat_pallas.1} parent=11 // pred_check_branch
          %253 = sbr.rel (%p251) target = $region32
        $region31: #{mixat_pallas.1} parent=11 // pred_region
          _
        $region32: #{mixat_pallas.1} parent=11 // pred_fallthru
          _
        // Predicated region
        $region33: #{mixat_pallas.1} parent=11 // pred_check
          %p254 = pneg %p169
        $region34: #{mixat_pallas.1} parent=11 // pred_check_branch
          %256 = sbr.rel (%p254) target = $region36
        $region35: #{mixat_pallas.1} parent=11 // pred_region
          _
        $region36: #{mixat_pallas.1} parent=11 // pred_fallthru
          _
        // Predicated region
        $region37: #{mixat_pallas.1} parent=11 // pred_check
          %p257 = pneg %p190
        $region38: #{mixat_pallas.1} parent=11 // pred_check_branch
          %259 = sbr.rel (%p257) target = $region40
        $region39: #{mixat_pallas.1} parent=11 // pred_region
          _
        $region40: #{mixat_pallas.1} parent=11 // pred_fallthru
          _
      $region12: #{mixat_pallas.1} parent=5 // pred_fallthru
        _
      %p260 = scmp.lt.s32.totalorder %s17, 2
      // Predicated region
      $region41: #{mixat_pallas.1} parent=5 // pred_check
        %p261 = pneg %p260
      $region42: #{mixat_pallas.1} parent=5 // pred_check_branch
        %263 = sbr.rel (%p261) target = $region44
      $region43: #{mixat_pallas.1} parent=5 // pred_region
        // Predicated region
        $region45: #{mixat_pallas.1} parent=43 // pred_check
          %p264 = pneg %p58
        $region46: #{mixat_pallas.1} parent=43 // pred_check_branch
          %266 = sbr.rel (%p264) target = $region48
        $region47: #{mixat_pallas.1} parent=43 // pred_region
          %p267 = scmp.lt.s32.totalorder %s17, 1
          %s268 = scalar_select %p267, %s17, 1
          %s269 = smul.addr %s268, 2
          %s270 = smul.addr %s269, 8
          %s271 = scalar_lea.vmem %s1, %s270
        $region48: #{mixat_pallas.1} parent=43 // pred_fallthru
          _
      $region44: #{mixat_pallas.1} parent=5 // pred_fallthru
        _
      %p272 = scmp.le.s32.totalorder 1, %s17
      %p273 = scmp.lt.s32.totalorder %s17, 3
      %p274 = pnand %p272, %p273
      %p275 = pneg %p274
      // Predicated region
      $region49: #{mixat_pallas.1} parent=5 // pred_check
        _
      $region50: #{mixat_pallas.1} parent=5 // pred_check_branch
        %277 = sbr.rel (%p274) target = $region52
      $region51: #{mixat_pallas.1} parent=5 // pred_region
        %s278 = ssub.s32 %s17, 1
        // Predicated region
        $region53: #{mixat_pallas.1} parent=51 // pred_check
          %p279 = pneg %p38
        $region54: #{mixat_pallas.1} parent=51 // pred_check_branch
          %281 = sbr.rel (%p279) target = $region56
        $region55: #{mixat_pallas.1} parent=51 // pred_region
          %282 = dma.done [#allocation4], 16
        $region56: #{mixat_pallas.1} parent=51 // pred_fallthru
          _
        %283 = sfence
        %p284 = pneg %p38
        %p285 = pneg %p35
        %p286 = scmp.lt.s32.totalorder %s22, 1
        %s287 = scalar_select %p286, %s22, 1
        %s288 = smul.addr %s287, 2
        %s289 = smul.addr %s288, 8
        %s290 = scalar_lea.vmem %s1, %s289
        %p291 = pneg %p64
        %p292 = pneg %p61
        %p293 = pneg %p85
        %p294 = pneg %p82
        %p295 = pneg %p106
        %p296 = pneg %p103
        %p297 = pneg %p127
        %p298 = pneg %p124
        %p299 = pneg %p148
        %p300 = pneg %p145
        %p301 = pneg %p169
        %p302 = pneg %p166
        %p303 = pneg %p190
        %p304 = pneg %p187
        %p305 = pneg %p216
        %p306 = pneg %p213
        %p307 = scmp.lt.s32.totalorder %s22, 1
        %s308 = scalar_select %p307, %s22, 1
        %s309 = smul.addr %s308, 2
        %s310 = smul.addr %s309, 8
        %s311 = scalar_lea.vmem %s8, %s310
        %p312 = scmp.lt.s32.totalorder %s22, 1
        %s313 = scalar_select %p312, %s22, 1
        %s314 = smul.addr %s313, 2
        %s315 = smul.addr %s314, 8
        %s316 = scalar_lea.vmem %s1, %s315
        %p317 = scmp.lt.s32.totalorder %s22, 1
        %s318 = scalar_select %p317, %s22, 1
        %s319 = smul.addr %s318, 2
        %s320 = smul.addr %s319, 8
        %s321 = scalar_lea.vmem %s8, %s320
        %v322 = vld [vmem:[%s316] sm:$0xff]
        %v323 = vld [vmem:[%s316 + $0x8] sm:$0xff]
        %v324 = vadd.f32 %v322, %v323
        %325 = vadd.xlane.f32.xlu0 %v324
        %v326 = vpop.xlane.xlu0 %325
        %v327 = vmul.f32 %v326, 0.00390625
        %v328 = vld [vmem:[%s2] sm:$0xff]
        %v329 = vld [vmem:[%s3] sm:$0x1]
        %v331 = vlaneseq
        %v332 = vand.u32 %v331, 127
        %v333 = vlaneseq
        %v334 = vshrl.u32 %v333, 7
        %v335 = vsub.s32 %v332, %v334
        %v336 = vrot.slane %v327, %v335
        %vm337 = vcmask 64512
        %v338 = vsel %vm337, %v336, 0
        %340 = vmatprep.subr.mxu0 0.0
        %341 = vmatpush1.msra.mxu0 0.0
        %342 = vmatprep.subr.mxu0 0.0
        %343 = vmatpush1.msra.mxu0 0.0
        %344 = vmatprep.subr.mxu0 0.0
        %345 = vmatpush1.msra.mxu0 0.0
        %346 = vmatprep.subr.mxu0 0.0
        %347 = vmatpush1.msra.mxu0 0.0
        %348 = vmatprep.subr.mxu0 0.0
        %349 = vmatpush1.msra.mxu0 0.0
        %350 = vmatprep.subr.mxu0 0.0
        %351 = vmatpush1.msra.mxu0 0.0
        %352 = vmatprep.subr.mxu0 0.0
        %353 = vmatpush1.msra.mxu0 0.0
        %354 = vmatprep.subr.mxu0 0.0
        %355 = vmatpush1.msra.mxu0 0.0
        %356 = vmatprep.subr.mxu0 0.0
        %357 = vmatpush1.msra.mxu0 0.0
        %358 = vmatprep.subr.mxu0 0.0
        %359 = vmatpush1.msra.mxu0 0.0
        %360 = vmatprep.subr.mxu0 0.0
        %361 = vmatpush1.msra.mxu0 0.0
        %362 = vmatprep.subr.mxu0 0.0
        %363 = vmatpush1.msra.mxu0 0.0
        %364 = vmatprep.subr.mxu0 0.0
        %365 = vmatpush1.msra.mxu0 0.0
        %366 = vmatprep.subr.mxu0 0.0
        %367 = vmatpush1.msra.mxu0 0.0
        %368 = vmatprep.subr.mxu0 0.0
        %369 = vmatpush1.msra.mxu0 0.0
        %370 = vmatprep.subr.mxu0 0.0
        %371 = vmatpush1.msra.mxu0 %v328
        %372 = vmatprep.subr.mxu0 0.0
        %373 = vmatpush2.msra.mxu0 0.0
        %374 = vmatprep.subr.mxu0 0.0
        %375 = vmatpush2.msra.mxu0 0.0
        %376 = vmatprep.subr.mxu0 0.0
        %377 = vmatpush2.msra.mxu0 0.0
        %378 = vmatprep.subr.mxu0 0.0
        %379 = vmatpush2.msra.mxu0 0.0
        %380 = vmatprep.subr.mxu0 0.0
        %381 = vmatpush2.msra.mxu0 0.0
        %382 = vmatprep.subr.mxu0 0.0
        %383 = vmatpush2.msra.mxu0 0.0
        %384 = vmatprep.subr.mxu0 0.0
        %385 = vmatpush2.msra.mxu0 0.0
        %386 = vmatprep.subr.mxu0 0.0
        %387 = vmatpush2.msra.mxu0 0.0
        %388 = vmatprep.subr.mxu0 0.0
        %389 = vmatpush2.msra.mxu0 0.0
        %390 = vmatprep.subr.mxu0 0.0
        %391 = vmatpush2.msra.mxu0 0.0
        %392 = vmatprep.subr.mxu0 0.0
        %393 = vmatpush2.msra.mxu0 0.0
        %394 = vmatprep.subr.mxu0 0.0
        %395 = vmatpush2.msra.mxu0 0.0
        %396 = vmatprep.subr.mxu0 0.0
        %397 = vmatpush2.msra.mxu0 0.0
        %398 = vmatprep.subr.mxu0 0.0
        %399 = vmatpush2.msra.mxu0 0.0
        %400 = vmatprep.subr.mxu0 0.0
        %401 = vmatpush2.msra.mxu0 0.0
        %402 = vmatprep.subr.mxu0 0.0
        %403 = vmatpush2.msra.mxu0 0.0
        %404 = vmatprep.mubr.f32.mxu0 0.0
        %405 = vmatmul.mubr.f32.gmra.mxu0 %v338
        %v406 = vpop.f32.mrf.mxu0
        %v407 = vadd.f32 %v329, %v406
        %v408 = vpop.f32.mrf.mxu0
        %409 = vdwg.mxu0
        %v410 = vmax.f32 %v407, 0.0
        %v411 = vld [vmem:[%s4] sm:$0x3]
        %v412 = vld [vmem:[%s5] sm:$0x1]
        %vm413 = vcmask 15360
        %v415 = vsel %vm413, %v410, 0
        %vm417 = vcmask 1041408
        %v419 = vsel %vm417, %v411, 0
        %421 = vmatprep.subr.mxu0 0.0
        %422 = vmatpush1.msra.mxu0 0.0
        %423 = vmatprep.subr.mxu0 0.0
        %424 = vmatpush1.msra.mxu0 0.0
        %425 = vmatprep.subr.mxu0 0.0
        %426 = vmatpush1.msra.mxu0 0.0
        %427 = vmatprep.subr.mxu0 0.0
        %428 = vmatpush1.msra.mxu0 0.0
        %429 = vmatprep.subr.mxu0 0.0
        %430 = vmatpush1.msra.mxu0 0.0
        %431 = vmatprep.subr.mxu0 0.0
        %432 = vmatpush1.msra.mxu0 0.0
        %433 = vmatprep.subr.mxu0 0.0
        %434 = vmatpush1.msra.mxu0 0.0
        %435 = vmatprep.subr.mxu0 0.0
        %436 = vmatpush1.msra.mxu0 0.0
        %437 = vmatprep.subr.mxu0 0.0
        %438 = vmatpush1.msra.mxu0 0.0
        %439 = vmatprep.subr.mxu0 0.0
        %440 = vmatpush1.msra.mxu0 0.0
        %441 = vmatprep.subr.mxu0 0.0
        %442 = vmatpush1.msra.mxu0 0.0
        %443 = vmatprep.subr.mxu0 0.0
        %444 = vmatpush1.msra.mxu0 0.0
        %445 = vmatprep.subr.mxu0 0.0
        %446 = vmatpush1.msra.mxu0 0.0
        %447 = vmatprep.subr.mxu0 0.0
        %448 = vmatpush1.msra.mxu0 0.0
        %449 = vmatprep.subr.mxu0 0.0
        %450 = vmatpush1.msra.mxu0 0.0
        %451 = vmatprep.subr.mxu0 0.0
        %452 = vmatpush1.msra.mxu0 %v419
        %453 = vmatprep.subr.mxu0 0.0
        %454 = vmatpush2.msra.mxu0 0.0
        %455 = vmatprep.subr.mxu0 0.0
        %456 = vmatpush2.msra.mxu0 0.0
        %457 = vmatprep.subr.mxu0 0.0
        %458 = vmatpush2.msra.mxu0 0.0
        %459 = vmatprep.subr.mxu0 0.0
        %460 = vmatpush2.msra.mxu0 0.0
        %461 = vmatprep.subr.mxu0 0.0
        %462 = vmatpush2.msra.mxu0 0.0
        %463 = vmatprep.subr.mxu0 0.0
        %464 = vmatpush2.msra.mxu0 0.0
        %465 = vmatprep.subr.mxu0 0.0
        %466 = vmatpush2.msra.mxu0 0.0
        %467 = vmatprep.subr.mxu0 0.0
        %468 = vmatpush2.msra.mxu0 0.0
        %469 = vmatprep.subr.mxu0 0.0
        %470 = vmatpush2.msra.mxu0 0.0
        %471 = vmatprep.subr.mxu0 0.0
        %472 = vmatpush2.msra.mxu0 0.0
        %473 = vmatprep.subr.mxu0 0.0
        %474 = vmatpush2.msra.mxu0 0.0
        %475 = vmatprep.subr.mxu0 0.0
        %476 = vmatpush2.msra.mxu0 0.0
        %477 = vmatprep.subr.mxu0 0.0
        %478 = vmatpush2.msra.mxu0 0.0
        %479 = vmatprep.subr.mxu0 0.0
        %480 = vmatpush2.msra.mxu0 0.0
        %481 = vmatprep.subr.mxu0 0.0
        %482 = vmatpush2.msra.mxu0 0.0
        %483 = vmatprep.subr.mxu0 0.0
        %484 = vmatpush2.msra.mxu0 0.0
        %485 = vmatprep.mubr.f32.mxu0 0.0
        %486 = vmatmul.mubr.f32.gmra.mxu0 %v415
        %v487 = vpop.f32.mrf.mxu0
        %v488 = vadd.f32 %v412, %v487
        %v489 = vpop.f32.mrf.mxu0
        %490 = vdwg.mxu0
        %v491 = vxor.u32 %v488, 2147483648
        %v492 = vmul.f32 %v491, 1.442695
        %v493 = vpow.pop %v492
        %v494 = vadd.f32 %v493, 1.0
        %v495 = vrcp.pop %v494
        %v496 = vmul.f32 1.0, %v495
        %v497 = vld [vmem:[%s6] sm:$0x1]
        %v498 = vlaneseq
        %v499 = vshrl.u32 %v498, 7
        %v500 = vsub.s32 0, %v499
        %v501 = vrot.slane %v497, %v500
        %503 = vbcast.lane.b32.xlu0 %v501, 256
        %v504 = vpop.permute.xlu0 %503
        %v505 = vmul.f32 %v322, %v504
        %v506 = vmul.f32 %v323, %v504
        %v507 = vrot.slane %v505, 4
        %v508 = vadd.f32 %v505, %v507
        %v509 = vrot.slane %v508, 2
        %v510 = vadd.f32 %v508, %v509
        %v511 = vrot.slane %v510, 1
        %v512 = vadd.f32 %v510, %v511
        %v513 = vrot.slane %v506, 4
        %v514 = vadd.f32 %v506, %v513
        %v515 = vrot.slane %v514, 2
        %v516 = vadd.f32 %v514, %v515
        %v517 = vrot.slane %v516, 1
        %v518 = vadd.f32 %v516, %v517
        %v519 = vld [vmem:[#allocation2] sm:$0x1]
        %521 = vset.pattern.permute.xlu0 0
        %522 = vperm.xlu0 %521, %v519
        %v523 = vpop.permute.xlu0 %522
        %v525 = vlaneseq
        %v526 = vshrl.u32 %v525, 7
        %v527 = vsub.s32 0, %v526
        %v528 = vrot.slane %v523, %v527
        %v529 = vadd.f32 %v512, %v528
        %v530 = vadd.f32 %v518, %v528
        %v531 = vxor.u32 %v529, 2147483648
        %v532 = vxor.u32 %v530, 2147483648
        %v533 = vmul.f32 %v531, 1.442695
        %v534 = vpow.pop %v533
        %v535 = vmul.f32 %v532, 1.442695
        %v536 = vpow.pop %v535
        %v537 = vadd.f32 %v534, 1.0
        %v538 = vadd.f32 %v536, 1.0
        %v539 = vrcp.pop %v537
        %v540 = vmul.f32 1.0, %v539
        %v541 = vrcp.pop %v538
        %v542 = vmul.f32 1.0, %v541
        %s543 = sld [smem:[#allocation3 + $0x1]]
        %s544 = sld [smem:[#allocation3 + $0x2]]
        %v545 = vstv %s544
        %v546 = vmul.f32 %v545, %v496
        %v547 = vstv %s543
        %v548 = vadd.f32 %v547, %v546
        %v549 = vlaneseq
        %v550 = vshrl.u32 %v549, 7
        %v551 = vsub.s32 0, %v550
        %v552 = vrot.slane %v548, %v551
        %554 = vbcast.lane.b32.xlu0 %v552, 256
        %v555 = vpop.permute.xlu0 %554
        %s556 = sld [smem:[#allocation3 + $0x3]]
        %v557 = vstv %s556
        %v558 = vmul.f32 %v557, %v540
        %v559 = vmul.f32 %v557, %v542
        %v560 = vadd.f32 %v555, %v558
        %v561 = vadd.f32 %v555, %v559
        %v562 = vmul.f32 %v322, %v560
        %v563 = vmul.f32 %v323, %v561
        %564 = vst [vmem:[%s321] sm:$0xff] %v562
        %565 = vst [vmem:[%s321 + $0x8] sm:$0xff] %v563
        %p566 = scmp.lt.s32.totalorder %s22, 1
        %s567 = scalar_select %p566, %s22, 1
        %s568 = smul.addr %s567, 2
        %s569 = smul.addr %s568, 8
        %s570 = scalar_lea.vmem %s8, %s569
        // Predicated region
        $region57: #{mixat_pallas.1} parent=51 // pred_check
          %p571 = pneg %p213
        $region58: #{mixat_pallas.1} parent=51 // pred_check_branch
          %573 = sbr.rel (%p571) target = $region60
        $region59: #{mixat_pallas.1} parent=51 // pred_region
          _
        $region60: #{mixat_pallas.1} parent=51 // pred_fallthru
          _
      $region52: #{mixat_pallas.1} parent=5 // pred_fallthru
        _
      %p574 = scmp.le.s32.totalorder 2, %s17
      // Predicated region
      $region61: #{mixat_pallas.1} parent=5 // pred_check
        %p575 = pneg %p574
      $region62: #{mixat_pallas.1} parent=5 // pred_check_branch
        %577 = sbr.rel (%p575) target = $region64
      $region63: #{mixat_pallas.1} parent=5 // pred_region
        %s578 = ssub.s32 %s17, 2
        // Predicated region
        $region65: #{mixat_pallas.1} parent=63 // pred_check
          %p579 = pneg %p219
        $region66: #{mixat_pallas.1} parent=63 // pred_check_branch
          %581 = sbr.rel (%p579) target = $region68
        $region67: #{mixat_pallas.1} parent=63 // pred_region
          %p582 = scmp.lt.s32.totalorder %s23, 1
          %s583 = scalar_select %p582, %s23, 1
          %s584 = smul.addr %s583, 2
          %s585 = smul.addr %s584, 8
          %s586 = scalar_lea.vmem %s8, %s585
        $region68: #{mixat_pallas.1} parent=63 // pred_fallthru
          _
      $region64: #{mixat_pallas.1} parent=5 // pred_fallthru
        _
    $region6: #{mixat_pallas.1} parent=1 // loop_footer
      %s21 = sadd.s32 1, %s17
    $region7: #{mixat_pallas.1} parent=1 // loop_footer_branch
      %16 = sbr.rel target = $region3
    $region8: #{mixat_pallas.1} parent=1 // loop_exit
      _
    %587 = vsyncpa [#allocation4], 1
    %s588 = scalar_lea.sflag [#allocation4], 1
    %589 = vsyncpa %s588, 1

</llo_original>
